<compile_context>
chip_gen: v7x
topology: tpu7x:2x2x1
jax: 0.10.0
libtpu: 0.0.40
codegen_flags: <defaults>
</compile_context>

<pallas_src>
import functools

import jax
import jax.numpy as jnp
from jax.experimental import pallas as pl
from jax.experimental.pallas import tpu as pltpu

NEG_INF = -1e30  # logit value for padded action lanes -> exp underflows to 0


def _round_up(n, m):
    return ((n + m - 1) // m) * m


def policy_kernel(x_ref, w1_ref, w2_ref, out_ref):
    # fc1 + bias (bias is the last row of w1_ref, picked by x's ones column);
    # operands may be bf16, accumulation is f32 on the MXU.
    h = jnp.maximum(
        jnp.dot(x_ref[...], w1_ref[...], preferred_element_type=jnp.float32),
        0.0,
    )                                                        # (TB, HP) f32
    # fc2 + bias (bias rides on the constant-1 hidden lane).
    logits = jnp.dot(h.astype(w2_ref.dtype), w2_ref[...],
                     preferred_element_type=jnp.float32)     # (TB, AP) f32
    # Numerically-stable softmax over the lane axis (padded lanes hold -1e30).
    # All elementwise math in f32 (v5e has no bf16 VPU/EUP); exact divide.
    m = jnp.max(logits, axis=1, keepdims=True)
    e = jnp.exp(logits - m)
    out_ref[...] = (e / jnp.sum(e, axis=1, keepdims=True)).astype(out_ref.dtype)


def pack_policy_params(w1, b1, w2, b2, *, h_pad=128, a_pad=128,
                       param_dtype=jnp.bfloat16):
    """One-time packing of the Policy parameters (hoisted out of the hot path).

    w1: (S, H), b1: (H,), w2: (H, A), b2: (A,)  ->
      w1a: (S+1, h_pad)  -- fc1 bias folded in as the last row
      w2a: (h_pad, a_pad) -- fc2 bias rides the constant-1 hidden lane
    Hidden lane h_pad-1 is reserved as the constant-1 unit; padded action
    columns get a -1e30 bias so softmax assigns them exactly 0.
    """
    S, H = w1.shape
    A = w2.shape[1]
    assert H <= h_pad - 1, "hidden lane h_pad-1 is reserved for the constant-1 unit"
    assert A <= a_pad

    w1a = jnp.zeros((S + 1, h_pad), jnp.float32)
    w1a = w1a.at[:S, :H].set(w1.astype(jnp.float32))
    w1a = w1a.at[S, :H].set(b1.reshape(-1).astype(jnp.float32))   # fc1 bias row
    w1a = w1a.at[S, h_pad - 1].set(1.0)                           # constant-1 unit

    w2a = jnp.zeros((h_pad, a_pad), jnp.float32)
    w2a = w2a.at[:H, :A].set(w2.astype(jnp.float32))
    w2a = w2a.at[h_pad - 1, :A].set(b2.reshape(-1).astype(jnp.float32))  # fc2 bias
    w2a = w2a.at[h_pad - 1, A:].set(NEG_INF)                      # kill padded actions

    return w1a.astype(param_dtype), w2a.astype(param_dtype)


@functools.partial(jax.jit, static_argnames=("a_size", "block_cap"))
def policy_forward(x, w1a, w2a, *, a_size, block_cap=512):
    """x: (B, s_size) f32.  w1a/w2a: packed params from pack_policy_params.
    Returns (B, a_size) f32 probabilities."""
    B, S = x.shape
    s_aug, h_pad = w1a.shape
    assert s_aug == S + 1, "packed w1a does not match x's feature size"
    a_pad = w2a.shape[1]
    dtype = w1a.dtype
    itemsize = jnp.dtype(dtype).itemsize

    # Batch tile: one grid step for typical batches (Bp = round_up(B, 8)),
    # fall back to multiple tiles only past block_cap rows.
    tb = min(block_cap, _round_up(max(B, 1), 8))
    Bp = _round_up(B, tb)
    grid = (Bp // tb,)

    # VMEM guard (v7x: 64 MiB physical / 32 MiB scoped per TC).  Double-buffered
    # x + out tiles plus resident weights must stay well inside the budget.
    vmem_bytes = 2 * (tb * (S + 1) * itemsize       # x tiles
                      + tb * a_pad * 4              # output tiles (f32)
                      + (S + 1) * h_pad * itemsize  # fc1 weights (resident)
                      + h_pad * a_pad * itemsize)   # fc2 weights (resident)
    assert vmem_bytes < 16 * 1024 * 1024, "batch tile too large for VMEM budget"

    # Augment x with a ones column (selects the fc1-bias row) and pad the batch.
    # Two ops, fused under this jit.
    xa = jnp.concatenate([x.astype(dtype), jnp.ones((B, 1), dtype)], axis=1)
    if Bp != B:
        xa = jnp.pad(xa, ((0, Bp - B), (0, 0)))

    # TODO(synk): if the consumer only samples/argmaxes, fuse the categorical
    # sample into the kernel to cut the (Bp, 128) output writeback ~128x.
    out = pl.pallas_call(
        policy_kernel,
        out_shape=jax.ShapeDtypeStruct((Bp, a_pad), jnp.float32),
        grid_spec=pltpu.PrefetchScalarGridSpec(
            num_scalar_prefetch=0,
            grid=grid,
            in_specs=[
                pl.BlockSpec((tb, S + 1), lambda i: (i, 0)),      # x tile
                pl.BlockSpec((S + 1, h_pad), lambda i: (0, 0)),   # fc1 weights (resident)
                pl.BlockSpec((h_pad, a_pad), lambda i: (0, 0)),   # fc2 weights (resident)
            ],
            out_specs=pl.BlockSpec((tb, a_pad), lambda i: (i, 0)),
        ),
        compiler_params=pltpu.CompilerParams(
            dimension_semantics=("parallel",),  # shards grid steps across TCs on v7x
        ),
    )(xa, w1a, w2a)

    return out[:B, :a_size]


def _reference(x, w1, b1, w2, b2):
    h = jnp.maximum(x @ w1 + b1[None, :], 0.0)
    logits = h @ w2 + b2[None, :]
    return jax.nn.softmax(logits, axis=1)


if __name__ == "__main__":
    # CartPole-like sizes: s_size=4 observations, a_size=2 actions, h_size=64.
    B, s_size, a_size, h_size = 2, 4, 2, 64

    key = jax.random.PRNGKey(0)
    k_x, k_w1, k_b1, k_w2, k_b2, k_xb = jax.random.split(key, 6)

    # PyTorch nn.Linear params, pre-transposed to (in, out) for the kernel.
    w1 = jax.random.normal(k_w1, (s_size, h_size), jnp.float32) * 0.1
    b1 = jax.random.normal(k_b1, (h_size,), jnp.float32) * 0.1
    w2 = jax.random.normal(k_w2, (h_size, a_size), jnp.float32) * 0.1
    b2 = jax.random.normal(k_b2, (a_size,), jnp.float32) * 0.1

    # One-time packing (out of the per-call path).  bf16 operands for the MXU
    # on v6e/v7x; an f32 variant is also checked below (v5e-safe path).
    w1a_bf, w2a_bf = pack_policy_params(w1, b1, w2, b2, param_dtype=jnp.bfloat16)
    w1a_f32, w2a_f32 = pack_policy_params(w1, b1, w2, b2, param_dtype=jnp.float32)

    # Small batch (matches Policy.act usage) — runs as a single 8-row tile.
    x = jax.random.normal(k_x, (B, s_size), jnp.float32)
    probs = jax.block_until_ready(policy_forward(x, w1a_bf, w2a_bf, a_size=a_size))
    probs_ref = _reference(x, w1, b1, w2, b2)
    assert probs.shape == (B, a_size)
    assert jnp.allclose(probs, probs_ref, atol=2e-2, rtol=2e-2), "mismatch (bf16, B=2)"
    assert jnp.allclose(jnp.sum(probs, axis=1), 1.0, atol=1e-5)

    probs_f32 = jax.block_until_ready(
        policy_forward(x, w1a_f32, w2a_f32, a_size=a_size))
    assert jnp.allclose(probs_f32, probs_ref, atol=1e-3, rtol=1e-3), "mismatch (f32, B=2)"

    # Larger batch — B=200 now runs as a single 200-row tile (no 256-row pad).
    Bb = 200
    xb = jax.random.normal(k_xb, (Bb, s_size), jnp.float32)
    probs_b = jax.block_until_ready(policy_forward(xb, w1a_bf, w2a_bf, a_size=a_size))
    probs_b_ref = _reference(xb, w1, b1, w2, b2)
    assert probs_b.shape == (Bb, a_size)
    assert jnp.allclose(probs_b, probs_b_ref, atol=2e-2, rtol=2e-2), "mismatch (bf16, B=200)"
    assert jnp.allclose(jnp.sum(probs_b, axis=1), 1.0, atol=1e-5)

    print("KERNEL_OK")
</pallas_src>

<mosaic_0001>
module attributes {stable_mosaic.version = 11 : i64} {
  func.func @policy_kernel(%arg0: i32, %arg1: memref<8x5xbf16, #tpu.memory_space<vmem>>, %arg2: memref<5x128xbf16, #tpu.memory_space<vmem>>, %arg3: memref<128x128xbf16, #tpu.memory_space<vmem>>, %arg4: memref<8x128xf32, #tpu.memory_space<vmem>>) attributes {dimension_semantics = [#tpu.dimension_semantics<parallel>], iteration_bounds = array<i64: 1>, scalar_prefetch = 0 : i64, scratch_operands = 0 : i64, tpu.core_type = #tpu.core_type<tc>, window_params = [{transform_indices = @transform_0, window_bounds = array<i64: 8, 5>}, {pipeline_mode = #tpu.pipeline_mode<synchronous>, transform_indices = @transform_1, window_bounds = array<i64: 5, 128>}, {pipeline_mode = #tpu.pipeline_mode<synchronous>, transform_indices = @transform_2, window_bounds = array<i64: 128, 128>}, {transform_indices = @transform_3, window_bounds = array<i64: 8, 128>}]} {
    %c0 = arith.constant 0 : index
    %c0_0 = arith.constant 0 : index
    %0 = vector.load %arg1[%c0, %c0_0] : memref<8x5xbf16, #tpu.memory_space<vmem>>, vector<8x5xbf16>
    %c0_1 = arith.constant 0 : index
    %c0_2 = arith.constant 0 : index
    %1 = vector.load %arg2[%c0_1, %c0_2] : memref<5x128xbf16, #tpu.memory_space<vmem>>, vector<5x128xbf16>
    %cst = arith.constant dense<0.000000e+00> : vector<8x128xf32>
    %2 = tpu.matmul %0, %1, %cst {dimension_numbers = #tpu.dot_dimension_numbers<[1], [0], [0], [1], [0, 0, 1, 1], [], []>} : vector<8x5xbf16>, vector<5x128xbf16>, vector<8x128xf32> -> vector<8x128xf32>
    %cst_3 = arith.constant 0.000000e+00 : f32
    %3 = vector.broadcast %cst_3 : f32 to vector<8x128xf32>
    %4 = arith.maximumf %2, %3 : vector<8x128xf32>
    %5 = arith.truncf %4 : vector<8x128xf32> to vector<8x128xbf16>
    %c0_4 = arith.constant 0 : index
    %c0_5 = arith.constant 0 : index
    %6 = vector.load %arg3[%c0_4, %c0_5] : memref<128x128xbf16, #tpu.memory_space<vmem>>, vector<128x128xbf16>
    %cst_6 = arith.constant dense<0.000000e+00> : vector<8x128xf32>
    %7 = tpu.matmul %5, %6, %cst_6 {dimension_numbers = #tpu.dot_dimension_numbers<[1], [0], [0], [1], [0, 0, 1, 1], [], []>} : vector<8x128xbf16>, vector<128x128xbf16>, vector<8x128xf32> -> vector<8x128xf32>
    %cst_7 = arith.constant dense<0xFF800000> : vector<8xf32>
    %8 = vector.multi_reduction <maximumf>, %7, %cst_7 [1] : vector<8x128xf32> to vector<8xf32>
    %9 = vector.shape_cast %8 : vector<8xf32> to vector<8x1xf32>
    %10 = vector.broadcast %9 : vector<8x1xf32> to vector<8x128xf32>
    %11 = arith.subf %7, %10 : vector<8x128xf32>
    %12 = math.exp %11 : vector<8x128xf32>
    %cst_8 = arith.constant dense<0.000000e+00> : vector<8xf32>
    %13 = vector.multi_reduction <add>, %12, %cst_8 [1] : vector<8x128xf32> to vector<8xf32>
    %14 = vector.shape_cast %13 : vector<8xf32> to vector<8x1xf32>
    %15 = vector.broadcast %14 : vector<8x1xf32> to vector<8x128xf32>
    %16 = arith.divf %12, %15 : vector<8x128xf32>
    %c0_9 = arith.constant 0 : index
    %c0_10 = arith.constant 0 : index
    %17 = vector.load %arg4[%c0_9, %c0_10] : memref<8x128xf32, #tpu.memory_space<vmem>>, vector<8x128xf32>
    tpu.vector_store %arg4[%c0_9, %c0_10], %16 {strides = array<i32>} : memref<8x128xf32, #tpu.memory_space<vmem>>, vector<8x128xf32>,
    return
  }
  func.func @transform_0(%arg0: i32) -> (i32, i32) {
    %c0_i32 = arith.constant 0 : i32
    %c0_i32_0 = arith.constant 0 : i32
    return %arg0, %c0_i32 : i32, i32
  }
  func.func @transform_1(%arg0: i32) -> (i32, i32) {
    %c0_i32 = arith.constant 0 : i32
    %c0_i32_0 = arith.constant 0 : i32
    %c0_i32_1 = arith.constant 0 : i32
    return %c0_i32, %c0_i32_0 : i32, i32
  }
  func.func @transform_2(%arg0: i32) -> (i32, i32) {
    %c0_i32 = arith.constant 0 : i32
    %c0_i32_0 = arith.constant 0 : i32
    %c0_i32_1 = arith.constant 0 : i32
    return %c0_i32, %c0_i32_0 : i32, i32
  }
  func.func @transform_3(%arg0: i32) -> (i32, i32) {
    %c0_i32 = arith.constant 0 : i32
    %c0_i32_0 = arith.constant 0 : i32
    return %arg0, %c0_i32 : i32, i32
  }
}

</mosaic_0001>

<llo_original>
// kernel: policy_forward.1
$region0: #{policy_forward.1}
  #allocation0 [shape = 'u32[]', space=smem, size = 0x4, offset = 0x4, fixed_abs, tag = 'smem constant byte address 0x4 - core index']
  #allocation1 [shape = 'u32[144,128]{1,0:T(1,128)}', space=vmem, size = 0x12000, scoped, tag = 'internal scratch']
  %s0 = inlined_call_operand.vmem [shape: bf16[8,5], index: 0, kind: input, shape index: {}]
  %s1 = inlined_call_operand.vmem [shape: bf16[5,128], index: 1, kind: input, shape index: {}]
  %s2 = inlined_call_operand.hbm [shape: bf16[128,128], index: 2, kind: input, shape index: {}]
  %s3 = inlined_call_operand.vmem [shape: f32[8,128], index: 3, kind: output, shape index: {}]
  %s4 = sld [smem:[#allocation0]]
  $region26: #{policy_forward.1} parent=0
    _
  %s6 = ssub.s32 1, %s4
  %s7 = scalar_select 0, %s6, %s4
  $region1: #{policy_forward.1} parent=0
    #allocation2 [shape = 'u8[32768]{0}', space=vmem, size = 0x8000, scoped, tag = 'input window, operand 2, single buffered']
    #allocation3 [shape = 's32[1]{0}', space=sflag, size = 0x4, scoped, tag = 'scoped memory for policy_forward.1']
    %8 = vsyncpa [#allocation3], 0
    // Predicated region
    $region2: #{policy_forward.1} parent=1 // pred_check
      _
    $region3: #{policy_forward.1} parent=1 // pred_check_branch
      %10 = sbr.rel (0) target = $region5
    $region4: #{policy_forward.1} parent=1 // pred_region
      _
    $region5: #{policy_forward.1} parent=1 // pred_fallthru
      _
    // Predicated region
    $region6: #{policy_forward.1} parent=1 // pred_check
      _
    $region7: #{policy_forward.1} parent=1 // pred_check_branch
      %12 = sbr.rel (0) target = $region9
    $region8: #{policy_forward.1} parent=1 // pred_region
      _
    $region9: #{policy_forward.1} parent=1 // pred_fallthru
      _
    // Predicated region
    $region10: #{policy_forward.1} parent=1 // pred_check
      _
    $region11: #{policy_forward.1} parent=1 // pred_check_branch
      %14 = sbr.rel (0) target = $region13
    $region12: #{policy_forward.1} parent=1 // pred_region
      %s16 = ssub.s32 1024, 1024
      %17 = vsyncadd [#allocation3], %s16
      %s18 = sshll.u32 [#allocation2], 4
      %s19 = int_to_ptr.vmem [resolvable:$true] %s18
      %24 = dma.hbm_to_vmem [thread:$0]  %s2, 1024, %s19, [#allocation3], 64, 64, 4
    $region13: #{policy_forward.1} parent=1 // pred_fallthru
      _
    // Predicated region
    $region14: #{policy_forward.1} parent=1 // pred_check
      _
    $region15: #{policy_forward.1} parent=1 // pred_check_branch
      %26 = sbr.rel (0) target = $region17
    $region16: #{policy_forward.1} parent=1 // pred_region
      %27 = dma.done [#allocation3], 1024
    $region17: #{policy_forward.1} parent=1 // pred_fallthru
      _
    %v29 = vld [vmem:[%s0] sm:$0xf]
    %v30 = vld [vmem:[%s1] sm:$0x7]
    %vm31 = vcmask 39936
    %v33 = vsel %vm31, %v29, 0
    %vm35 = vcmask 1041408
    %vm36 = vcmask 1042432
    %v37 = vsel %vm35, 4294967295, 65535
    %v38 = vsel %vm36, %v37, 0
    %v40 = vand.u32 %v30, %v38
    %42 = vmatprep.subr.bf16.mxu0 0
    %43 = vmatpush1.bf16.msra.mxu0 %v40
    %44 = vmatprep.subr.bf16.mxu0 0
    %45 = vmatpush1.bf16.msra.mxu0 0
    %46 = vmatprep.subr.bf16.mxu0 0
    %47 = vmatpush1.bf16.msra.mxu0 0
    %48 = vmatprep.subr.bf16.mxu0 0
    %49 = vmatpush1.bf16.msra.mxu0 0
    %50 = vmatprep.subr.bf16.mxu0 0
    %51 = vmatpush1.bf16.msra.mxu0 0
    %52 = vmatprep.subr.bf16.mxu0 0
    %53 = vmatpush1.bf16.msra.mxu0 0
    %54 = vmatprep.subr.bf16.mxu0 0
    %55 = vmatpush1.bf16.msra.mxu0 0
    %56 = vmatprep.subr.bf16.mxu0 0
    %57 = vmatpush1.bf16.msra.mxu0 0
    %58 = vmatprep.subr.bf16.mxu0 0
    %59 = vmatpush1.bf16.msra.mxu0 0
    %60 = vmatprep.subr.bf16.mxu0 0
    %61 = vmatpush1.bf16.msra.mxu0 0
    %62 = vmatprep.subr.bf16.mxu0 0
    %63 = vmatpush1.bf16.msra.mxu0 0
    %64 = vmatprep.subr.bf16.mxu0 0
    %65 = vmatpush1.bf16.msra.mxu0 0
    %66 = vmatprep.subr.bf16.mxu0 0
    %67 = vmatpush1.bf16.msra.mxu0 0
    %68 = vmatprep.subr.bf16.mxu0 0
    %69 = vmatpush1.bf16.msra.mxu0 0
    %70 = vmatprep.subr.bf16.mxu0 0
    %71 = vmatpush1.bf16.msra.mxu0 0
    %72 = vmatprep.subr.bf16.mxu0 0
    %73 = vmatpush1.bf16.msra.mxu0 0
    %74 = vmatprep.mubr.bf16.mxu0 0
    %75 = vmatmul.mubr.bf16.gmra.mrb[0].mxu0 %v33
    %v76 = vpop.f32.mrb[0].mxu0
    %v77 = vadd.f32 0.0, %v76
    %v78 = vpop.f32.mrb[0].mxu0
    %v79 = vpop.f32.mrb[0].mxu0
    %v80 = vpop.f32.mrb[0].mxu0
    %81 = vdwg.mxu0
    %v82 = vmax.f32 %v77, 0.0
    %v83 = vpack.c.bf16 %v82, %v82
    %v84 = vld [vmem:[#allocation2] sm:$0xf]
    %v85 = vld [vmem:[#allocation2 + $0x4] sm:$0xf]
    %v86 = vld [vmem:[#allocation2 + $0x8] sm:$0xf]
    %v87 = vld [vmem:[#allocation2 + $0xc] sm:$0xf]
    %v88 = vld [vmem:[#allocation2 + $0x10] sm:$0xf]
    %v89 = vld [vmem:[#allocation2 + $0x14] sm:$0xf]
    %v90 = vld [vmem:[#allocation2 + $0x18] sm:$0xf]
    %v91 = vld [vmem:[#allocation2 + $0x1c] sm:$0xf]
    %v92 = vld [vmem:[#allocation2 + $0x20] sm:$0xf]
    %v93 = vld [vmem:[#allocation2 + $0x24] sm:$0xf]
    %v94 = vld [vmem:[#allocation2 + $0x28] sm:$0xf]
    %v95 = vld [vmem:[#allocation2 + $0x2c] sm:$0xf]
    %v96 = vld [vmem:[#allocation2 + $0x30] sm:$0xf]
    %v97 = vld [vmem:[#allocation2 + $0x34] sm:$0xf]
    %v98 = vld [vmem:[#allocation2 + $0x38] sm:$0xf]
    %v99 = vld [vmem:[#allocation2 + $0x3c] sm:$0xf]
    %v116 = vunpack.c.l.b16 %v84
    %v117 = vunpack.c.l.b16 %v85
    %v118 = vunpack.c.l.b16 %v86
    %v119 = vunpack.c.l.b16 %v87
    %v120 = vunpack.c.l.b16 %v88
    %v121 = vunpack.c.l.b16 %v89
    %v122 = vunpack.c.l.b16 %v90
    %v123 = vunpack.c.l.b16 %v91
    %v124 = vunpack.c.l.b16 %v92
    %v125 = vunpack.c.l.b16 %v93
    %v126 = vunpack.c.l.b16 %v94
    %v127 = vunpack.c.l.b16 %v95
    %v128 = vunpack.c.l.b16 %v96
    %v129 = vunpack.c.l.b16 %v97
    %v130 = vunpack.c.l.b16 %v98
    %v131 = vunpack.c.l.b16 %v99
    %v132 = vpack.c.b16 %v117, %v116
    %v133 = vpack.c.b16 %v119, %v118
    %v134 = vpack.c.b16 %v121, %v120
    %v135 = vpack.c.b16 %v123, %v122
    %v136 = vpack.c.b16 %v125, %v124
    %v137 = vpack.c.b16 %v127, %v126
    %v138 = vpack.c.b16 %v129, %v128
    %v139 = vpack.c.b16 %v131, %v130
    %148 = vmatprep.subr.bf16.mxu0 0
    %149 = vmatpush1.bf16.msra.mxu0 %v132
    %150 = vmatprep.subr.bf16.mxu0 0
    %151 = vmatpush1.bf16.msra.mxu0 %v133
    %152 = vmatprep.subr.bf16.mxu0 0
    %153 = vmatpush1.bf16.msra.mxu0 %v134
    %154 = vmatprep.subr.bf16.mxu0 0
    %155 = vmatpush1.bf16.msra.mxu0 %v135
    %156 = vmatprep.subr.bf16.mxu0 0
    %157 = vmatpush1.bf16.msra.mxu0 %v136
    %158 = vmatprep.subr.bf16.mxu0 0
    %159 = vmatpush1.bf16.msra.mxu0 %v137
    %160 = vmatprep.subr.bf16.mxu0 0
    %161 = vmatpush1.bf16.msra.mxu0 %v138
    %162 = vmatprep.subr.bf16.mxu0 0
    %163 = vmatpush1.bf16.msra.mxu0 %v139
    %164 = vmatprep.subr.bf16.mxu0 0
    %165 = vmatpush1.bf16.msra.mxu0 0
    %166 = vmatprep.subr.bf16.mxu0 0
    %167 = vmatpush1.bf16.msra.mxu0 0
    %168 = vmatprep.subr.bf16.mxu0 0
    %169 = vmatpush1.bf16.msra.mxu0 0
    %170 = vmatprep.subr.bf16.mxu0 0
    %171 = vmatpush1.bf16.msra.mxu0 0
    %172 = vmatprep.subr.bf16.mxu0 0
    %173 = vmatpush1.bf16.msra.mxu0 0
    %174 = vmatprep.subr.bf16.mxu0 0
    %175 = vmatpush1.bf16.msra.mxu0 0
    %176 = vmatprep.subr.bf16.mxu0 0
    %177 = vmatpush1.bf16.msra.mxu0 0
    %178 = vmatprep.subr.bf16.mxu0 0
    %179 = vmatpush1.bf16.msra.mxu0 0
    %180 = vmatprep.mubr.bf16.mxu0 0
    %181 = vmatmul.mubr.bf16.gmra.mrb[0].mxu0 %v83
    %v182 = vpop.f32.mrb[0].mxu0
    %v183 = vadd.f32 0.0, %v182
    %v184 = vpop.f32.mrb[0].mxu0
    %v185 = vpop.f32.mrb[0].mxu0
    %v186 = vpop.f32.mrb[0].mxu0
    %187 = vdwg.mxu0
    %188 = vmax.xlane.f32.xlu0 %v183
    %v189 = vpop.xlane.xlu0 %188
    %v190 = vsub.f32 %v183, %v189
    %v191 = vmul.f32 %v190, 1.442695
    %v192 = vpow.pop %v191
    %193 = vadd.xlane.f32.xlu0 %v192
    %v194 = vpop.xlane.xlu0 %193
    %v195 = vrcp.pop %v194
    %v196 = vmul.f32 %v192, %v195
    %197 = vst [vmem:[%s3] sm:$0xff] %v196
    // Predicated region
    $region18: #{policy_forward.1} parent=1 // pred_check
      _
    $region19: #{policy_forward.1} parent=1 // pred_check_branch
      %199 = sbr.rel (0) target = $region21
    $region20: #{policy_forward.1} parent=1 // pred_region
      _
    $region21: #{policy_forward.1} parent=1 // pred_fallthru
      _
    // Predicated region
    $region22: #{policy_forward.1} parent=1 // pred_check
      _
    $region23: #{policy_forward.1} parent=1 // pred_check_branch
      %201 = sbr.rel (0) target = $region25
    $region24: #{policy_forward.1} parent=1 // pred_region
      _
    $region25: #{policy_forward.1} parent=1 // pred_fallthru
      _
    %202 = vsyncpa [#allocation3], 1

</llo_original>
